<compile_context>
chip_gen: v5e
topology: v5e:2x2
jax: 0.10.0
libtpu: 0.0.40
codegen_flags: <defaults>
</compile_context>

<pallas_src>
import functools

import jax
import jax.numpy as jnp
from jax import lax
from jax.experimental import pallas as pl
from jax.experimental.pallas import tpu as pltpu


def _time_encoding_kernel(coeff_ref, x_ref, o_ref, *, t_tile):
    # coeff_ref: [T_TILE, B] f32, coeff[t, b] = mask[b, t] / (lengths[b] - 1)
    # x_ref/o_ref: [T_TILE, B, D]
    tt, b = coeff_ref.shape
    t0 = (pl.program_id(0) * t_tile).astype(jnp.float32)          # global row offset
    t_idx = lax.broadcasted_iota(jnp.int32, (tt, b), 0).astype(jnp.float32) + t0
    time = coeff_ref[...] * t_idx                                  # [T_TILE, B] f32
    # Upcast for the add (v5e VPU has no bf16 ALU), downcast on store.
    o_ref[...] = (x_ref[...].astype(jnp.float32) + time[..., None]).astype(o_ref.dtype)


def time_encoding(x, mask, lengths, *, vmem_budget_bytes=24 * 1024 * 1024):
    """TimeEncoding forward (dropout = identity / eval mode).

    x:       [T, B, D] float32 or bfloat16
    mask:    [B, T]    bool / int
    lengths: [B]       int
    """
    T, B, D = x.shape

    # Tiny precompute in plain JAX: one input stream instead of mask + lengths,
    # and no divide inside the (mem-bound) kernel.
    coeff = (mask.astype(jnp.float32)
             / (lengths.astype(jnp.float32)[:, None] - 1.0)).T     # [T, B]
    # NOTE: lengths == 1 yields inf/NaN — this exactly matches the PyTorch
    # reference semantics (no guard added on purpose).

    # Pick the largest T tile whose pipelined working set (2 double-buffered x
    # blocks + 2 double-buffered out blocks) fits the VMEM budget.
    bytes_per_row = B * D * x.dtype.itemsize
    t_tile = max(1, vmem_budget_bytes // (4 * bytes_per_row))
    if t_tile >= T:
        t_tile = T                                   # single block covers T
    else:
        t_tile = max(8, (t_tile // 8) * 8)           # sublane-aligned for the [T, B] coeff block
    grid = (pl.cdiv(T, t_tile),)

    cost = pl.CostEstimate(
        flops=2 * T * B * D,
        transcendentals=0,
        bytes_accessed=2 * T * B * D * x.dtype.itemsize + T * B * 4,
    )

    return pl.pallas_call(
        functools.partial(_time_encoding_kernel, t_tile=t_tile),
        out_shape=jax.ShapeDtypeStruct((T, B, D), x.dtype),
        grid=grid,
        in_specs=[
            pl.BlockSpec((t_tile, B), lambda i: (i, 0)),
            pl.BlockSpec((t_tile, B, D), lambda i: (i, 0, 0)),
        ],
        out_specs=pl.BlockSpec((t_tile, B, D), lambda i: (i, 0, 0)),
        compiler_params=pltpu.CompilerParams(
            dimension_semantics=("parallel",),       # shard T loop across v7x's 2 TCs
            vmem_limit_bytes=32 * 1024 * 1024,       # raise v5e's 16 MiB default; safe on v7x
        ),
        cost_estimate=cost,
    )(coeff, x)


if __name__ == "__main__":
    key = jax.random.PRNGKey(0)
    T, B, D = 80, 4, 128  # seq=80, batch=4, d_model=128 (lane-dense last dim)

    kx, _ = jax.random.split(key)
    x = jax.random.normal(kx, (T, B, D), dtype=jnp.float32)
    lengths = jnp.array([80, 37, 64, 5], dtype=jnp.int32)           # [B]
    mask = (jnp.arange(T)[None, :] < lengths[:, None])              # [B, T] bool

    # Pure-JAX reference mirroring the PyTorch forward (eval mode, dropout = identity).
    time_ref = mask.astype(jnp.float32) / (lengths.astype(jnp.float32)[:, None] - 1.0)  # [B, T]
    time_ref = time_ref * jnp.arange(T, dtype=jnp.float32)[None, :]                     # [B, T]
    ref = x + time_ref.T[..., None]                                                     # [T, B, D]

    # 1) Default budget: whole T fits in one block (grid=(1,)).
    out = jax.block_until_ready(time_encoding(x, mask, lengths))
    assert out.shape == (T, B, D) and out.dtype == jnp.float32
    assert jnp.allclose(out, ref, atol=1e-5), "mismatch vs reference (single block)"

    # 2) Small budget to force T tiling (exercises the pipelined grid + iota offset).
    small_budget = 4 * 16 * B * D * 4                 # -> t_tile = 16, grid = (5,)
    out_tiled = jax.block_until_ready(
        time_encoding(x, mask, lengths, vmem_budget_bytes=small_budget))
    assert jnp.allclose(out_tiled, ref, atol=1e-5), "mismatch vs reference (tiled grid)"

    print("KERNEL_OK")
</pallas_src>

<mosaic_0001>
module attributes {stable_mosaic.version = 11 : i64} {
  func.func @_time_encoding_kernel(%arg0: i32, %arg1: memref<80x4xf32, #tpu.memory_space<vmem>>, %arg2: memref<80x4x128xf32, #tpu.memory_space<vmem>>, %arg3: memref<80x4x128xf32, #tpu.memory_space<vmem>>) attributes {dimension_semantics = [#tpu.dimension_semantics<parallel>], iteration_bounds = array<i64: 1>, scalar_prefetch = 0 : i64, scratch_operands = 0 : i64, tpu.core_type = #tpu.core_type<tc>, window_params = [{transform_indices = @transform_0, window_bounds = array<i64: 80, 4>}, {transform_indices = @transform_1, window_bounds = array<i64: 80, 4, 128>}, {transform_indices = @transform_2, window_bounds = array<i64: 80, 4, 128>}]} {
    %c80_i32 = arith.constant 80 : i32
    %0 = arith.muli %arg0, %c80_i32 : i32
    %1 = arith.sitofp %0 : i32 to f32
    %2 = tpu.iota {dimensions = array<i32: 0>} : vector<80x4xi32>
    %3 = arith.sitofp %2 : vector<80x4xi32> to vector<80x4xf32>
    %4 = vector.broadcast %1 : f32 to vector<80x4xf32>
    %5 = arith.addf %3, %4 : vector<80x4xf32>
    %c0 = arith.constant 0 : index
    %c0_0 = arith.constant 0 : index
    %6 = vector.load %arg1[%c0, %c0_0] : memref<80x4xf32, #tpu.memory_space<vmem>>, vector<80x4xf32>
    %7 = arith.mulf %6, %5 : vector<80x4xf32>
    %c0_1 = arith.constant 0 : index
    %c0_2 = arith.constant 0 : index
    %c0_3 = arith.constant 0 : index
    %8 = vector.load %arg2[%c0_1, %c0_2, %c0_3] : memref<80x4x128xf32, #tpu.memory_space<vmem>>, vector<80x4x128xf32>
    %9 = vector.shape_cast %7 : vector<80x4xf32> to vector<80x4x1xf32>
    %10 = vector.broadcast %9 : vector<80x4x1xf32> to vector<80x4x128xf32>
    %11 = arith.addf %8, %10 : vector<80x4x128xf32>
    %c0_4 = arith.constant 0 : index
    %c0_5 = arith.constant 0 : index
    %c0_6 = arith.constant 0 : index
    %12 = vector.load %arg3[%c0_4, %c0_5, %c0_6] : memref<80x4x128xf32, #tpu.memory_space<vmem>>, vector<80x4x128xf32>
    tpu.vector_store %arg3[%c0_4, %c0_5, %c0_6], %11 {strides = array<i32>} : memref<80x4x128xf32, #tpu.memory_space<vmem>>, vector<80x4x128xf32>,
    return
  }
  func.func @transform_0(%arg0: i32) -> (i32, i32) {
    %c0_i32 = arith.constant 0 : i32
    %c0_i32_0 = arith.constant 0 : i32
    return %arg0, %c0_i32 : i32, i32
  }
  func.func @transform_1(%arg0: i32) -> (i32, i32, i32) {
    %c0_i32 = arith.constant 0 : i32
    %c0_i32_0 = arith.constant 0 : i32
    %c0_i32_1 = arith.constant 0 : i32
    return %arg0, %c0_i32, %c0_i32_0 : i32, i32, i32
  }
  func.func @transform_2(%arg0: i32) -> (i32, i32, i32) {
    %c0_i32 = arith.constant 0 : i32
    %c0_i32_0 = arith.constant 0 : i32
    %c0_i32_1 = arith.constant 0 : i32
    return %arg0, %c0_i32, %c0_i32_0 : i32, i32, i32
  }
}

</mosaic_0001>

<llo_original>
// kernel: tpu_custom_call.1
$region0: #{tpu_custom_call.1}
  #allocation0 [shape = 'u32[]', space=smem, size = 0x4, offset = 0x4, fixed_abs, tag = 'smem constant byte address 0x4 - core index']
  #allocation1 [shape = 'u32[72,128]{1,0:T(1,128)}', space=vmem, size = 0x9000, scoped, tag = 'internal scratch']
  %s0 = inlined_call_operand.vmem [shape: f32[80,4], index: 0, kind: input, shape index: {}]
  %s1 = inlined_call_operand.hbm [shape: f32[80,4,128], index: 1, kind: input, shape index: {}]
  %s2 = inlined_call_operand.hbm [shape: f32[80,4,128], index: 2, kind: output, shape index: {}]
  %s3 = sld [smem:[#allocation0]]
  $region22: #{tpu_custom_call.1} parent=0
    _
  %s5 = ssub.s32 1, %s3
  %s6 = scalar_select 0, %s5, %s3
  $region1: #{tpu_custom_call.1} parent=0
    #allocation2 [shape = 'u8[163840]{0}', space=vmem, size = 0x28000, scoped, tag = 'input window, operand 1, single buffered']
    #allocation3 [shape = 's32[1]{0}', space=sflag, size = 0x4, scoped, tag = 'scoped memory for tpu_custom_call.1']
    #allocation4 [shape = 's32[1]{0}', space=sflag, size = 0x4, scoped, tag = 'scoped memory for tpu_custom_call.1']
    #allocation5 [shape = 'u8[163840]{0}', space=vmem, size = 0x28000, scoped, tag = 'output window, operand 0, single buffered']
    %7 = vsyncpa [#allocation3], 0
    %8 = vsyncpa [#allocation4], 0
    // Predicated region
    $region2: #{tpu_custom_call.1} parent=1 // pred_check
      _
    $region3: #{tpu_custom_call.1} parent=1 // pred_check_branch
      %10 = sbr.rel (0) target = $region5
    $region4: #{tpu_custom_call.1} parent=1 // pred_region
      _
    $region5: #{tpu_custom_call.1} parent=1 // pred_fallthru
      _
    // Predicated region
    $region6: #{tpu_custom_call.1} parent=1 // pred_check
      _
    $region7: #{tpu_custom_call.1} parent=1 // pred_check_branch
      %12 = sbr.rel (0) target = $region9
    $region8: #{tpu_custom_call.1} parent=1 // pred_region
      %14 = vsyncadd [#allocation3], 0
      %s15 = sshll.u32 %s1, 4
      %s16 = int_to_ptr.hbm [resolvable:$true] %s15
      %s17 = sshll.u32 [#allocation2], 4
      %s18 = int_to_ptr.vmem [resolvable:$true] %s17
      %23 = dma.hbm_to_vmem [thread:$0]  %s16, 5120, %s18, [#allocation3], 64, 64, 4
    $region9: #{tpu_custom_call.1} parent=1 // pred_fallthru
      _
    // Predicated region
    $region10: #{tpu_custom_call.1} parent=1 // pred_check
      _
    $region11: #{tpu_custom_call.1} parent=1 // pred_check_branch
      %25 = sbr.rel (0) target = $region13
    $region12: #{tpu_custom_call.1} parent=1 // pred_region
      %27 = dma.done [#allocation3], 5120
    $region13: #{tpu_custom_call.1} parent=1 // pred_fallthru
      _
    %s28 = smul.u32 0, 80
    %s29 = scvt.s32.f32 %s28
    %v30 = vlaneseq
    %v31 = vshrl.u32 %v30, 7
    %v32 = vadd.s32 %v31, 8
    %v33 = vadd.s32 %v31, 16
    %v34 = vadd.s32 %v31, 24
    %v35 = vadd.s32 %v31, 32
    %v36 = vadd.s32 %v31, 40
    %v37 = vadd.s32 %v31, 48
    %v38 = vadd.s32 %v31, 56
    %v39 = vadd.s32 %v31, 64
    %v40 = vadd.s32 %v31, 72
    %v41 = vcvt.s32.f32 %v31
    %v42 = vcvt.s32.f32 %v32
    %v43 = vcvt.s32.f32 %v33
    %v44 = vcvt.s32.f32 %v34
    %v45 = vcvt.s32.f32 %v35
    %v46 = vcvt.s32.f32 %v36
    %v47 = vcvt.s32.f32 %v37
    %v48 = vcvt.s32.f32 %v38
    %v49 = vcvt.s32.f32 %v39
    %v50 = vcvt.s32.f32 %v40
    %v51 = vstv %s29
    %v52 = vadd.f32 %v41, %v51
    %v53 = vadd.f32 %v42, %v51
    %v54 = vadd.f32 %v43, %v51
    %v55 = vadd.f32 %v44, %v51
    %v56 = vadd.f32 %v45, %v51
    %v57 = vadd.f32 %v46, %v51
    %v58 = vadd.f32 %v47, %v51
    %v59 = vadd.f32 %v48, %v51
    %v60 = vadd.f32 %v49, %v51
    %v61 = vadd.f32 %v50, %v51
    %v62 = vld [vmem:[%s0] sm:$0xff]
    %v63 = vld [vmem:[%s0 + $0x8] sm:$0xff]
    %v64 = vld [vmem:[%s0 + $0x10] sm:$0xff]
    %v65 = vld [vmem:[%s0 + $0x18] sm:$0xff]
    %v66 = vld [vmem:[%s0 + $0x20] sm:$0xff]
    %v67 = vld [vmem:[%s0 + $0x28] sm:$0xff]
    %v68 = vld [vmem:[%s0 + $0x30] sm:$0xff]
    %v69 = vld [vmem:[%s0 + $0x38] sm:$0xff]
    %v70 = vld [vmem:[%s0 + $0x40] sm:$0xff]
    %v71 = vld [vmem:[%s0 + $0x48] sm:$0xff]
    %v72 = vmul.f32 %v62, %v52
    %v73 = vmul.f32 %v63, %v53
    %v74 = vmul.f32 %v64, %v54
    %v75 = vmul.f32 %v65, %v55
    %v76 = vmul.f32 %v66, %v56
    %v77 = vmul.f32 %v67, %v57
    %v78 = vmul.f32 %v68, %v58
    %v79 = vmul.f32 %v69, %v59
    %v80 = vmul.f32 %v70, %v60
    %v81 = vmul.f32 %v71, %v61
    %v82 = vld [vmem:[#allocation2] sm:$0xf]
    %v83 = vld [vmem:[#allocation2 + $0x4] sm:$0xf]
    %v84 = vld [vmem:[#allocation2 + $0x8] sm:$0xf]
    %v85 = vld [vmem:[#allocation2 + $0xc] sm:$0xf]
    %v86 = vld [vmem:[#allocation2 + $0x10] sm:$0xf]
    %v87 = vld [vmem:[#allocation2 + $0x14] sm:$0xf]
    %v88 = vld [vmem:[#allocation2 + $0x18] sm:$0xf]
    %v89 = vld [vmem:[#allocation2 + $0x1c] sm:$0xf]
    %v90 = vld [vmem:[#allocation2 + $0x20] sm:$0xf]
    %v91 = vld [vmem:[#allocation2 + $0x24] sm:$0xf]
    %v92 = vld [vmem:[#allocation2 + $0x28] sm:$0xf]
    %v93 = vld [vmem:[#allocation2 + $0x2c] sm:$0xf]
    %v94 = vld [vmem:[#allocation2 + $0x30] sm:$0xf]
    %v95 = vld [vmem:[#allocation2 + $0x34] sm:$0xf]
    %v96 = vld [vmem:[#allocation2 + $0x38] sm:$0xf]
    %v97 = vld [vmem:[#allocation2 + $0x3c] sm:$0xf]
    %v98 = vld [vmem:[#allocation2 + $0x40] sm:$0xf]
    %v99 = vld [vmem:[#allocation2 + $0x44] sm:$0xf]
    %v100 = vld [vmem:[#allocation2 + $0x48] sm:$0xf]
    %v101 = vld [vmem:[#allocation2 + $0x4c] sm:$0xf]
    %v102 = vld [vmem:[#allocation2 + $0x50] sm:$0xf]
    %v103 = vld [vmem:[#allocation2 + $0x54] sm:$0xf]
    %v104 = vld [vmem:[#allocation2 + $0x58] sm:$0xf]
    %v105 = vld [vmem:[#allocation2 + $0x5c] sm:$0xf]
    %v106 = vld [vmem:[#allocation2 + $0x60] sm:$0xf]
    %v107 = vld [vmem:[#allocation2 + $0x64] sm:$0xf]
    %v108 = vld [vmem:[#allocation2 + $0x68] sm:$0xf]
    %v109 = vld [vmem:[#allocation2 + $0x6c] sm:$0xf]
    %v110 = vld [vmem:[#allocation2 + $0x70] sm:$0xf]
    %v111 = vld [vmem:[#allocation2 + $0x74] sm:$0xf]
    %v112 = vld [vmem:[#allocation2 + $0x78] sm:$0xf]
    %v113 = vld [vmem:[#allocation2 + $0x7c] sm:$0xf]
    %v114 = vld [vmem:[#allocation2 + $0x80] sm:$0xf]
    %v115 = vld [vmem:[#allocation2 + $0x84] sm:$0xf]
    %v116 = vld [vmem:[#allocation2 + $0x88] sm:$0xf]
    %v117 = vld [vmem:[#allocation2 + $0x8c] sm:$0xf]
    %v118 = vld [vmem:[#allocation2 + $0x90] sm:$0xf]
    %v119 = vld [vmem:[#allocation2 + $0x94] sm:$0xf]
    %v120 = vld [vmem:[#allocation2 + $0x98] sm:$0xf]
    %v121 = vld [vmem:[#allocation2 + $0x9c] sm:$0xf]
    %v122 = vld [vmem:[#allocation2 + $0xa0] sm:$0xf]
    %v123 = vld [vmem:[#allocation2 + $0xa4] sm:$0xf]
    %v124 = vld [vmem:[#allocation2 + $0xa8] sm:$0xf]
    %v125 = vld [vmem:[#allocation2 + $0xac] sm:$0xf]
    %v126 = vld [vmem:[#allocation2 + $0xb0] sm:$0xf]
    %v127 = vld [vmem:[#allocation2 + $0xb4] sm:$0xf]
    %v128 = vld [vmem:[#allocation2 + $0xb8] sm:$0xf]
    %v129 = vld [vmem:[#allocation2 + $0xbc] sm:$0xf]
    %v130 = vld [vmem:[#allocation2 + $0xc0] sm:$0xf]
    %v131 = vld [vmem:[#allocation2 + $0xc4] sm:$0xf]
    %v132 = vld [vmem:[#allocation2 + $0xc8] sm:$0xf]
    %v133 = vld [vmem:[#allocation2 + $0xcc] sm:$0xf]
    %v134 = vld [vmem:[#allocation2 + $0xd0] sm:$0xf]
    %v135 = vld [vmem:[#allocation2 + $0xd4] sm:$0xf]
    %v136 = vld [vmem:[#allocation2 + $0xd8] sm:$0xf]
    %v137 = vld [vmem:[#allocation2 + $0xdc] sm:$0xf]
    %v138 = vld [vmem:[#allocation2 + $0xe0] sm:$0xf]
    %v139 = vld [vmem:[#allocation2 + $0xe4] sm:$0xf]
    %v140 = vld [vmem:[#allocation2 + $0xe8] sm:$0xf]
    %v141 = vld [vmem:[#allocation2 + $0xec] sm:$0xf]
    %v142 = vld [vmem:[#allocation2 + $0xf0] sm:$0xf]
    %v143 = vld [vmem:[#allocation2 + $0xf4] sm:$0xf]
    %v144 = vld [vmem:[#allocation2 + $0xf8] sm:$0xf]
    %v145 = vld [vmem:[#allocation2 + $0xfc] sm:$0xf]
    %v146 = vld [vmem:[#allocation2 + $0x100] sm:$0xf]
    %v147 = vld [vmem:[#allocation2 + $0x104] sm:$0xf]
    %v148 = vld [vmem:[#allocation2 + $0x108] sm:$0xf]
    %v149 = vld [vmem:[#allocation2 + $0x10c] sm:$0xf]
    %v150 = vld [vmem:[#allocation2 + $0x110] sm:$0xf]
    %v151 = vld [vmem:[#allocation2 + $0x114] sm:$0xf]
    %v152 = vld [vmem:[#allocation2 + $0x118] sm:$0xf]
    %v153 = vld [vmem:[#allocation2 + $0x11c] sm:$0xf]
    %v154 = vld [vmem:[#allocation2 + $0x120] sm:$0xf]
    %v155 = vld [vmem:[#allocation2 + $0x124] sm:$0xf]
    %v156 = vld [vmem:[#allocation2 + $0x128] sm:$0xf]
    %v157 = vld [vmem:[#allocation2 + $0x12c] sm:$0xf]
    %v158 = vld [vmem:[#allocation2 + $0x130] sm:$0xf]
    %v159 = vld [vmem:[#allocation2 + $0x134] sm:$0xf]
    %v160 = vld [vmem:[#allocation2 + $0x138] sm:$0xf]
    %v161 = vld [vmem:[#allocation2 + $0x13c] sm:$0xf]
    %v162 = vperm.slane %v72, 0
    %v163 = vlaneseq
    %v164 = vshrl.u32 %v163, 7
    %166 = vset.pattern.permute.xlu0 %v164
    %167 = vperm.xlu0 %166, %v162
    %v168 = vpop.permute.xlu0 %167
    %v169 = vperm.slane %v72, 1
    %v170 = vlaneseq
    %v171 = vshrl.u32 %v170, 7
    %173 = vset.pattern.permute.xlu0 %v171
    %174 = vperm.xlu0 %173, %v169
    %v175 = vpop.permute.xlu0 %174
    %v176 = vperm.slane %v72, 2
    %v177 = vlaneseq
    %v178 = vshrl.u32 %v177, 7
    %180 = vset.pattern.permute.xlu0 %v178
    %181 = vperm.xlu0 %180, %v176
    %v182 = vpop.permute.xlu0 %181
    %v183 = vperm.slane %v72, 3
    %v184 = vlaneseq
    %v185 = vshrl.u32 %v184, 7
    %187 = vset.pattern.permute.xlu0 %v185
    %188 = vperm.xlu0 %187, %v183
    %v189 = vpop.permute.xlu0 %188
    %v190 = vperm.slane %v72, 4
    %v191 = vlaneseq
    %v192 = vshrl.u32 %v191, 7
    %194 = vset.pattern.permute.xlu0 %v192
    %195 = vperm.xlu0 %194, %v190
    %v196 = vpop.permute.xlu0 %195
    %v197 = vperm.slane %v72, 5
    %v198 = vlaneseq
    %v199 = vshrl.u32 %v198, 7
    %201 = vset.pattern.permute.xlu0 %v199
    %202 = vperm.xlu0 %201, %v197
    %v203 = vpop.permute.xlu0 %202
    %v204 = vperm.slane %v72, 6
    %v205 = vlaneseq
    %v206 = vshrl.u32 %v205, 7
    %208 = vset.pattern.permute.xlu0 %v206
    %209 = vperm.xlu0 %208, %v204
    %v210 = vpop.permute.xlu0 %209
    %v211 = vperm.slane %v72, 7
    %v212 = vlaneseq
    %v213 = vshrl.u32 %v212, 7
    %215 = vset.pattern.permute.xlu0 %v213
    %216 = vperm.xlu0 %215, %v211
    %v217 = vpop.permute.xlu0 %216
    %v218 = vperm.slane %v73, 0
    %v219 = vlaneseq
    %v220 = vshrl.u32 %v219, 7
    %222 = vset.pattern.permute.xlu0 %v220
    %223 = vperm.xlu0 %222, %v218
    %v224 = vpop.permute.xlu0 %223
    %v225 = vperm.slane %v73, 1
    %v226 = vlaneseq
    %v227 = vshrl.u32 %v226, 7
    %229 = vset.pattern.permute.xlu0 %v227
    %230 = vperm.xlu0 %229, %v225
    %v231 = vpop.permute.xlu0 %230
    %v232 = vperm.slane %v73, 2
    %v233 = vlaneseq
    %v234 = vshrl.u32 %v233, 7
    %236 = vset.pattern.permute.xlu0 %v234
    %237 = vperm.xlu0 %236, %v232
    %v238 = vpop.permute.xlu0 %237
    %v239 = vperm.slane %v73, 3
    %v240 = vlaneseq
    %v241 = vshrl.u32 %v240, 7
    %243 = vset.pattern.permute.xlu0 %v241
    %244 = vperm.xlu0 %243, %v239
    %v245 = vpop.permute.xlu0 %244
    %v246 = vperm.slane %v73, 4
    %v247 = vlaneseq
    %v248 = vshrl.u32 %v247, 7
    %250 = vset.pattern.permute.xlu0 %v248
    %251 = vperm.xlu0 %250, %v246
    %v252 = vpop.permute.xlu0 %251
    %v253 = vperm.slane %v73, 5
    %v254 = vlaneseq
    %v255 = vshrl.u32 %v254, 7
    %257 = vset.pattern.permute.xlu0 %v255
    %258 = vperm.xlu0 %257, %v253
    %v259 = vpop.permute.xlu0 %258
    %v260 = vperm.slane %v73, 6
    %v261 = vlaneseq
    %v262 = vshrl.u32 %v261, 7
    %264 = vset.pattern.permute.xlu0 %v262
    %265 = vperm.xlu0 %264, %v260
    %v266 = vpop.permute.xlu0 %265
    %v267 = vperm.slane %v73, 7
    %v268 = vlaneseq
    %v269 = vshrl.u32 %v268, 7
    %271 = vset.pattern.permute.xlu0 %v269
    %272 = vperm.xlu0 %271, %v267
    %v273 = vpop.permute.xlu0 %272
    %v274 = vperm.slane %v74, 0
    %v275 = vlaneseq
    %v276 = vshrl.u32 %v275, 7
    %278 = vset.pattern.permute.xlu0 %v276
    %279 = vperm.xlu0 %278, %v274
    %v280 = vpop.permute.xlu0 %279
    %v281 = vperm.slane %v74, 1
    %v282 = vlaneseq
    %v283 = vshrl.u32 %v282, 7
    %285 = vset.pattern.permute.xlu0 %v283
    %286 = vperm.xlu0 %285, %v281
    %v287 = vpop.permute.xlu0 %286
    %v288 = vperm.slane %v74, 2
    %v289 = vlaneseq
    %v290 = vshrl.u32 %v289, 7
    %292 = vset.pattern.permute.xlu0 %v290
    %293 = vperm.xlu0 %292, %v288
    %v294 = vpop.permute.xlu0 %293
    %v295 = vperm.slane %v74, 3
    %v296 = vlaneseq
    %v297 = vshrl.u32 %v296, 7
    %299 = vset.pattern.permute.xlu0 %v297
    %300 = vperm.xlu0 %299, %v295
    %v301 = vpop.permute.xlu0 %300
    %v302 = vperm.slane %v74, 4
    %v303 = vlaneseq
    %v304 = vshrl.u32 %v303, 7
    %306 = vset.pattern.permute.xlu0 %v304
    %307 = vperm.xlu0 %306, %v302
    %v308 = vpop.permute.xlu0 %307
    %v309 = vperm.slane %v74, 5
    %v310 = vlaneseq
    %v311 = vshrl.u32 %v310, 7
    %313 = vset.pattern.permute.xlu0 %v311
    %314 = vperm.xlu0 %313, %v309
    %v315 = vpop.permute.xlu0 %314
    %v316 = vperm.slane %v74, 6
    %v317 = vlaneseq
    %v318 = vshrl.u32 %v317, 7
    %320 = vset.pattern.permute.xlu0 %v318
    %321 = vperm.xlu0 %320, %v316
    %v322 = vpop.permute.xlu0 %321
    %v323 = vperm.slane %v74, 7
    %v324 = vlaneseq
    %v325 = vshrl.u32 %v324, 7
    %327 = vset.pattern.permute.xlu0 %v325
    %328 = vperm.xlu0 %327, %v323
    %v329 = vpop.permute.xlu0 %328
    %v330 = vperm.slane %v75, 0
    %v331 = vlaneseq
    %v332 = vshrl.u32 %v331, 7
    %334 = vset.pattern.permute.xlu0 %v332
    %335 = vperm.xlu0 %334, %v330
    %v336 = vpop.permute.xlu0 %335
    %v337 = vperm.slane %v75, 1
    %v338 = vlaneseq
    %v339 = vshrl.u32 %v338, 7
    %341 = vset.pattern.permute.xlu0 %v339
    %342 = vperm.xlu0 %341, %v337
    %v343 = vpop.permute.xlu0 %342
    %v344 = vperm.slane %v75, 2
    %v345 = vlaneseq
    %v346 = vshrl.u32 %v345, 7
    %348 = vset.pattern.permute.xlu0 %v346
    %349 = vperm.xlu0 %348, %v344
    %v350 = vpop.permute.xlu0 %349
    %v351 = vperm.slane %v75, 3
    %v352 = vlaneseq
    %v353 = vshrl.u32 %v352, 7
    %355 = vset.pattern.permute.xlu0 %v353
    %356 = vperm.xlu0 %355, %v351
    %v357 = vpop.permute.xlu0 %356
    %v358 = vperm.slane %v75, 4
    %v359 = vlaneseq
    %v360 = vshrl.u32 %v359, 7
    %362 = vset.pattern.permute.xlu0 %v360
    %363 = vperm.xlu0 %362, %v358
    %v364 = vpop.permute.xlu0 %363
    %v365 = vperm.slane %v75, 5
    %v366 = vlaneseq
    %v367 = vshrl.u32 %v366, 7
    %369 = vset.pattern.permute.xlu0 %v367
    %370 = vperm.xlu0 %369, %v365
    %v371 = vpop.permute.xlu0 %370
    %v372 = vperm.slane %v75, 6
    %v373 = vlaneseq
    %v374 = vshrl.u32 %v373, 7
    %376 = vset.pattern.permute.xlu0 %v374
    %377 = vperm.xlu0 %376, %v372
    %v378 = vpop.permute.xlu0 %377
    %v379 = vperm.slane %v75, 7
    %v380 = vlaneseq
    %v381 = vshrl.u32 %v380, 7
    %383 = vset.pattern.permute.xlu0 %v381
    %384 = vperm.xlu0 %383, %v379
    %v385 = vpop.permute.xlu0 %384
    %v386 = vperm.slane %v76, 0
    %v387 = vlaneseq
    %v388 = vshrl.u32 %v387, 7
    %390 = vset.pattern.permute.xlu0 %v388
    %391 = vperm.xlu0 %390, %v386
    %v392 = vpop.permute.xlu0 %391
    %v393 = vperm.slane %v76, 1
    %v394 = vlaneseq
    %v395 = vshrl.u32 %v394, 7
    %397 = vset.pattern.permute.xlu0 %v395
    %398 = vperm.xlu0 %397, %v393
    %v399 = vpop.permute.xlu0 %398
    %v400 = vperm.slane %v76, 2
    %v401 = vlaneseq
    %v402 = vshrl.u32 %v401, 7
    %404 = vset.pattern.permute.xlu0 %v402
    %405 = vperm.xlu0 %404, %v400
    %v406 = vpop.permute.xlu0 %405
    %v407 = vperm.slane %v76, 3
    %v408 = vlaneseq
    %v409 = vshrl.u32 %v408, 7
    %411 = vset.pattern.permute.xlu0 %v409
    %412 = vperm.xlu0 %411, %v407
    %v413 = vpop.permute.xlu0 %412
    %v414 = vperm.slane %v76, 4
    %v415 = vlaneseq
    %v416 = vshrl.u32 %v415, 7
    %418 = vset.pattern.permute.xlu0 %v416
    %419 = vperm.xlu0 %418, %v414
    %v420 = vpop.permute.xlu0 %419
    %v421 = vperm.slane %v76, 5
    %v422 = vlaneseq
    %v423 = vshrl.u32 %v422, 7
    %425 = vset.pattern.permute.xlu0 %v423
    %426 = vperm.xlu0 %425, %v421
    %v427 = vpop.permute.xlu0 %426
    %v428 = vperm.slane %v76, 6
    %v429 = vlaneseq
    %v430 = vshrl.u32 %v429, 7
    %432 = vset.pattern.permute.xlu0 %v430
    %433 = vperm.xlu0 %432, %v428
    %v434 = vpop.permute.xlu0 %433
    %v435 = vperm.slane %v76, 7
    %v436 = vlaneseq
    %v437 = vshrl.u32 %v436, 7
    %439 = vset.pattern.permute.xlu0 %v437
    %440 = vperm.xlu0 %439, %v435
    %v441 = vpop.permute.xlu0 %440
    %v442 = vperm.slane %v77, 0
    %v443 = vlaneseq
    %v444 = vshrl.u32 %v443, 7
    %446 = vset.pattern.permute.xlu0 %v444
    %447 = vperm.xlu0 %446, %v442
    %v448 = vpop.permute.xlu0 %447
    %v449 = vperm.slane %v77, 1
    %v450 = vlaneseq
    %v451 = vshrl.u32 %v450, 7
    %453 = vset.pattern.permute.xlu0 %v451
    %454 = vperm.xlu0 %453, %v449
    %v455 = vpop.permute.xlu0 %454
    %v456 = vperm.slane %v77, 2
    %v457 = vlaneseq
    %v458 = vshrl.u32 %v457, 7
    %460 = vset.pattern.permute.xlu0 %v458
    %461 = vperm.xlu0 %460, %v456
    %v462 = vpop.permute.xlu0 %461
    %v463 = vperm.slane %v77, 3
    %v464 = vlaneseq
    %v465 = vshrl.u32 %v464, 7
    %467 = vset.pattern.permute.xlu0 %v465
    %468 = vperm.xlu0 %467, %v463
    %v469 = vpop.permute.xlu0 %468
    %v470 = vperm.slane %v77, 4
    %v471 = vlaneseq
    %v472 = vshrl.u32 %v471, 7
    %474 = vset.pattern.permute.xlu0 %v472
    %475 = vperm.xlu0 %474, %v470
    %v476 = vpop.permute.xlu0 %475
    %v477 = vperm.slane %v77, 5
    %v478 = vlaneseq
    %v479 = vshrl.u32 %v478, 7
    %481 = vset.pattern.permute.xlu0 %v479
    %482 = vperm.xlu0 %481, %v477
    %v483 = vpop.permute.xlu0 %482
    %v484 = vperm.slane %v77, 6
    %v485 = vlaneseq
    %v486 = vshrl.u32 %v485, 7
    %488 = vset.pattern.permute.xlu0 %v486
    %489 = vperm.xlu0 %488, %v484
    %v490 = vpop.permute.xlu0 %489
    %v491 = vperm.slane %v77, 7
    %v492 = vlaneseq
    %v493 = vshrl.u32 %v492, 7
    %495 = vset.pattern.permute.xlu0 %v493
    %496 = vperm.xlu0 %495, %v491
    %v497 = vpop.permute.xlu0 %496
    %v498 = vperm.slane %v78, 0
    %v499 = vlaneseq
    %v500 = vshrl.u32 %v499, 7
    %502 = vset.pattern.permute.xlu0 %v500
    %503 = vperm.xlu0 %502, %v498
    %v504 = vpop.permute.xlu0 %503
    %v505 = vperm.slane %v78, 1
    %v506 = vlaneseq
    %v507 = vshrl.u32 %v506, 7
    %509 = vset.pattern.permute.xlu0 %v507
    %510 = vperm.xlu0 %509, %v505
    %v511 = vpop.permute.xlu0 %510
    %v512 = vperm.slane %v78, 2
    %v513 = vlaneseq
    %v514 = vshrl.u32 %v513, 7
    %516 = vset.pattern.permute.xlu0 %v514
    %517 = vperm.xlu0 %516, %v512
    %v518 = vpop.permute.xlu0 %517
    %v519 = vperm.slane %v78, 3
    %v520 = vlaneseq
    %v521 = vshrl.u32 %v520, 7
    %523 = vset.pattern.permute.xlu0 %v521
    %524 = vperm.xlu0 %523, %v519
    %v525 = vpop.permute.xlu0 %524
    %v526 = vperm.slane %v78, 4
    %v527 = vlaneseq
    %v528 = vshrl.u32 %v527, 7
    %530 = vset.pattern.permute.xlu0 %v528
    %531 = vperm.xlu0 %530, %v526
    %v532 = vpop.permute.xlu0 %531
    %v533 = vperm.slane %v78, 5
    %v534 = vlaneseq
    %v535 = vshrl.u32 %v534, 7
    %537 = vset.pattern.permute.xlu0 %v535
    %538 = vperm.xlu0 %537, %v533
    %v539 = vpop.permute.xlu0 %538
    %v540 = vperm.slane %v78, 6
    %v541 = vlaneseq
    %v542 = vshrl.u32 %v541, 7
    %544 = vset.pattern.permute.xlu0 %v542
    %545 = vperm.xlu0 %544, %v540
    %v546 = vpop.permute.xlu0 %545
    %v547 = vperm.slane %v78, 7
    %v548 = vlaneseq
    %v549 = vshrl.u32 %v548, 7
    %551 = vset.pattern.permute.xlu0 %v549
    %552 = vperm.xlu0 %551, %v547
    %v553 = vpop.permute.xlu0 %552
    %v554 = vperm.slane %v79, 0
    %v555 = vlaneseq
    %v556 = vshrl.u32 %v555, 7
    %558 = vset.pattern.permute.xlu0 %v556
    %559 = vperm.xlu0 %558, %v554
    %v560 = vpop.permute.xlu0 %559
    %v561 = vperm.slane %v79, 1
    %v562 = vlaneseq
    %v563 = vshrl.u32 %v562, 7
    %565 = vset.pattern.permute.xlu0 %v563
    %566 = vperm.xlu0 %565, %v561
    %v567 = vpop.permute.xlu0 %566
    %v568 = vperm.slane %v79, 2
    %v569 = vlaneseq
    %v570 = vshrl.u32 %v569, 7
    %572 = vset.pattern.permute.xlu0 %v570
    %573 = vperm.xlu0 %572, %v568
    %v574 = vpop.permute.xlu0 %573
    %v575 = vperm.slane %v79, 3
    %v576 = vlaneseq
    %v577 = vshrl.u32 %v576, 7
    %579 = vset.pattern.permute.xlu0 %v577
    %580 = vperm.xlu0 %579, %v575
    %v581 = vpop.permute.xlu0 %580
    %v582 = vperm.slane %v79, 4
    %v583 = vlaneseq
    %v584 = vshrl.u32 %v583, 7
    %586 = vset.pattern.permute.xlu0 %v584
    %587 = vperm.xlu0 %586, %v582
    %v588 = vpop.permute.xlu0 %587
    %v589 = vperm.slane %v79, 5
    %v590 = vlaneseq
    %v591 = vshrl.u32 %v590, 7
    %593 = vset.pattern.permute.xlu0 %v591
    %594 = vperm.xlu0 %593, %v589
    %v595 = vpop.permute.xlu0 %594
    %v596 = vperm.slane %v79, 6
    %v597 = vlaneseq
    %v598 = vshrl.u32 %v597, 7
    %600 = vset.pattern.permute.xlu0 %v598
    %601 = vperm.xlu0 %600, %v596
    %v602 = vpop.permute.xlu0 %601
    %v603 = vperm.slane %v79, 7
    %v604 = vlaneseq
    %v605 = vshrl.u32 %v604, 7
    %607 = vset.pattern.permute.xlu0 %v605
    %608 = vperm.xlu0 %607, %v603
    %v609 = vpop.permute.xlu0 %608
    %v610 = vperm.slane %v80, 0
    %v611 = vlaneseq
    %v612 = vshrl.u32 %v611, 7
    %614 = vset.pattern.permute.xlu0 %v612
    %615 = vperm.xlu0 %614, %v610
    %v616 = vpop.permute.xlu0 %615
    %v617 = vperm.slane %v80, 1
    %v618 = vlaneseq
    %v619 = vshrl.u32 %v618, 7
    %621 = vset.pattern.permute.xlu0 %v619
    %622 = vperm.xlu0 %621, %v617
    %v623 = vpop.permute.xlu0 %622
    %v624 = vperm.slane %v80, 2
    %v625 = vlaneseq
    %v626 = vshrl.u32 %v625, 7
    %628 = vset.pattern.permute.xlu0 %v626
    %629 = vperm.xlu0 %628, %v624
    %v630 = vpop.permute.xlu0 %629
    %v631 = vperm.slane %v80, 3
    %v632 = vlaneseq
    %v633 = vshrl.u32 %v632, 7
    %635 = vset.pattern.permute.xlu0 %v633
    %636 = vperm.xlu0 %635, %v631
    %v637 = vpop.permute.xlu0 %636
    %v638 = vperm.slane %v80, 4
    %v639 = vlaneseq
    %v640 = vshrl.u32 %v639, 7
    %642 = vset.pattern.permute.xlu0 %v640
    %643 = vperm.xlu0 %642, %v638
    %v644 = vpop.permute.xlu0 %643
    %v645 = vperm.slane %v80, 5
    %v646 = vlaneseq
    %v647 = vshrl.u32 %v646, 7
    %649 = vset.pattern.permute.xlu0 %v647
    %650 = vperm.xlu0 %649, %v645
    %v651 = vpop.permute.xlu0 %650
    %v652 = vperm.slane %v80, 6
    %v653 = vlaneseq
    %v654 = vshrl.u32 %v653, 7
    %656 = vset.pattern.permute.xlu0 %v654
    %657 = vperm.xlu0 %656, %v652
    %v658 = vpop.permute.xlu0 %657
    %v659 = vperm.slane %v80, 7
    %v660 = vlaneseq
    %v661 = vshrl.u32 %v660, 7
    %663 = vset.pattern.permute.xlu0 %v661
    %664 = vperm.xlu0 %663, %v659
    %v665 = vpop.permute.xlu0 %664
    %v666 = vperm.slane %v81, 0
    %v667 = vlaneseq
    %v668 = vshrl.u32 %v667, 7
    %670 = vset.pattern.permute.xlu0 %v668
    %671 = vperm.xlu0 %670, %v666
    %v672 = vpop.permute.xlu0 %671
    %v673 = vperm.slane %v81, 1
    %v674 = vlaneseq
    %v675 = vshrl.u32 %v674, 7
    %677 = vset.pattern.permute.xlu0 %v675
    %678 = vperm.xlu0 %677, %v673
    %v679 = vpop.permute.xlu0 %678
    %v680 = vperm.slane %v81, 2
    %v681 = vlaneseq
    %v682 = vshrl.u32 %v681, 7
    %684 = vset.pattern.permute.xlu0 %v682
    %685 = vperm.xlu0 %684, %v680
    %v686 = vpop.permute.xlu0 %685
    %v687 = vperm.slane %v81, 3
    %v688 = vlaneseq
    %v689 = vshrl.u32 %v688, 7
    %691 = vset.pattern.permute.xlu0 %v689
    %692 = vperm.xlu0 %691, %v687
    %v693 = vpop.permute.xlu0 %692
    %v694 = vperm.slane %v81, 4
    %v695 = vlaneseq
    %v696 = vshrl.u32 %v695, 7
    %698 = vset.pattern.permute.xlu0 %v696
    %699 = vperm.xlu0 %698, %v694
    %v700 = vpop.permute.xlu0 %699
    %v701 = vperm.slane %v81, 5
    %v702 = vlaneseq
    %v703 = vshrl.u32 %v702, 7
    %705 = vset.pattern.permute.xlu0 %v703
    %706 = vperm.xlu0 %705, %v701
    %v707 = vpop.permute.xlu0 %706
    %v708 = vperm.slane %v81, 6
    %v709 = vlaneseq
    %v710 = vshrl.u32 %v709, 7
    %712 = vset.pattern.permute.xlu0 %v710
    %713 = vperm.xlu0 %712, %v708
    %v714 = vpop.permute.xlu0 %713
    %v715 = vperm.slane %v81, 7
    %v716 = vlaneseq
    %v717 = vshrl.u32 %v716, 7
    %719 = vset.pattern.permute.xlu0 %v717
    %720 = vperm.xlu0 %719, %v715
    %v721 = vpop.permute.xlu0 %720
    %v722 = vadd.f32 %v82, %v168
    %v723 = vadd.f32 %v83, %v175
    %v724 = vadd.f32 %v84, %v182
    %v725 = vadd.f32 %v85, %v189
    %v726 = vadd.f32 %v86, %v196
    %v727 = vadd.f32 %v87, %v203
    %v728 = vadd.f32 %v88, %v210
    %v729 = vadd.f32 %v89, %v217
    %v730 = vadd.f32 %v90, %v224
    %v731 = vadd.f32 %v91, %v231
    %v732 = vadd.f32 %v92, %v238
    %v733 = vadd.f32 %v93, %v245
    %v734 = vadd.f32 %v94, %v252
    %v735 = vadd.f32 %v95, %v259
    %v736 = vadd.f32 %v96, %v266
    %v737 = vadd.f32 %v97, %v273
    %v738 = vadd.f32 %v98, %v280
    %v739 = vadd.f32 %v99, %v287
    %v740 = vadd.f32 %v100, %v294
    %v741 = vadd.f32 %v101, %v301
    %v742 = vadd.f32 %v102, %v308
    %v743 = vadd.f32 %v103, %v315
    %v744 = vadd.f32 %v104, %v322
    %v745 = vadd.f32 %v105, %v329
    %v746 = vadd.f32 %v106, %v336
    %v747 = vadd.f32 %v107, %v343
    %v748 = vadd.f32 %v108, %v350
    %v749 = vadd.f32 %v109, %v357
    %v750 = vadd.f32 %v110, %v364
    %v751 = vadd.f32 %v111, %v371
    %v752 = vadd.f32 %v112, %v378
    %v753 = vadd.f32 %v113, %v385
    %v754 = vadd.f32 %v114, %v392
    %v755 = vadd.f32 %v115, %v399
    %v756 = vadd.f32 %v116, %v406
    %v757 = vadd.f32 %v117, %v413
    %v758 = vadd.f32 %v118, %v420
    %v759 = vadd.f32 %v119, %v427
    %v760 = vadd.f32 %v120, %v434
    %v761 = vadd.f32 %v121, %v441
    %v762 = vadd.f32 %v122, %v448
    %v763 = vadd.f32 %v123, %v455
    %v764 = vadd.f32 %v124, %v462
    %v765 = vadd.f32 %v125, %v469
    %v766 = vadd.f32 %v126, %v476
    %v767 = vadd.f32 %v127, %v483
    %v768 = vadd.f32 %v128, %v490
    %v769 = vadd.f32 %v129, %v497
    %v770 = vadd.f32 %v130, %v504
    %v771 = vadd.f32 %v131, %v511
    %v772 = vadd.f32 %v132, %v518
    %v773 = vadd.f32 %v133, %v525
    %v774 = vadd.f32 %v134, %v532
    %v775 = vadd.f32 %v135, %v539
    %v776 = vadd.f32 %v136, %v546
    %v777 = vadd.f32 %v137, %v553
    %v778 = vadd.f32 %v138, %v560
    %v779 = vadd.f32 %v139, %v567
    %v780 = vadd.f32 %v140, %v574
    %v781 = vadd.f32 %v141, %v581
    %v782 = vadd.f32 %v142, %v588
    %v783 = vadd.f32 %v143, %v595
    %v784 = vadd.f32 %v144, %v602
    %v785 = vadd.f32 %v145, %v609
    %v786 = vadd.f32 %v146, %v616
    %v787 = vadd.f32 %v147, %v623
    %v788 = vadd.f32 %v148, %v630
    %v789 = vadd.f32 %v149, %v637
    %v790 = vadd.f32 %v150, %v644
    %v791 = vadd.f32 %v151, %v651
    %v792 = vadd.f32 %v152, %v658
    %v793 = vadd.f32 %v153, %v665
    %v794 = vadd.f32 %v154, %v672
    %v795 = vadd.f32 %v155, %v679
    %v796 = vadd.f32 %v156, %v686
    %v797 = vadd.f32 %v157, %v693
    %v798 = vadd.f32 %v158, %v700
    %v799 = vadd.f32 %v159, %v707
    %v800 = vadd.f32 %v160, %v714
    %v801 = vadd.f32 %v161, %v721
    %802 = vst [vmem:[#allocation5] sm:$0xf] %v722
    %803 = vst [vmem:[#allocation5 + $0x4] sm:$0xf] %v723
    %804 = vst [vmem:[#allocation5 + $0x8] sm:$0xf] %v724
    %805 = vst [vmem:[#allocation5 + $0xc] sm:$0xf] %v725
    %806 = vst [vmem:[#allocation5 + $0x10] sm:$0xf] %v726
    %807 = vst [vmem:[#allocation5 + $0x14] sm:$0xf] %v727
    %808 = vst [vmem:[#allocation5 + $0x18] sm:$0xf] %v728
    %809 = vst [vmem:[#allocation5 + $0x1c] sm:$0xf] %v729
    %810 = vst [vmem:[#allocation5 + $0x20] sm:$0xf] %v730
    %811 = vst [vmem:[#allocation5 + $0x24] sm:$0xf] %v731
    %812 = vst [vmem:[#allocation5 + $0x28] sm:$0xf] %v732
    %813 = vst [vmem:[#allocation5 + $0x2c] sm:$0xf] %v733
    %814 = vst [vmem:[#allocation5 + $0x30] sm:$0xf] %v734
    %815 = vst [vmem:[#allocation5 + $0x34] sm:$0xf] %v735
    %816 = vst [vmem:[#allocation5 + $0x38] sm:$0xf] %v736
    %817 = vst [vmem:[#allocation5 + $0x3c] sm:$0xf] %v737
    %818 = vst [vmem:[#allocation5 + $0x40] sm:$0xf] %v738
    %819 = vst [vmem:[#allocation5 + $0x44] sm:$0xf] %v739
    %820 = vst [vmem:[#allocation5 + $0x48] sm:$0xf] %v740
    %821 = vst [vmem:[#allocation5 + $0x4c] sm:$0xf] %v741
    %822 = vst [vmem:[#allocation5 + $0x50] sm:$0xf] %v742
    %823 = vst [vmem:[#allocation5 + $0x54] sm:$0xf] %v743
    %824 = vst [vmem:[#allocation5 + $0x58] sm:$0xf] %v744
    %825 = vst [vmem:[#allocation5 + $0x5c] sm:$0xf] %v745
    %826 = vst [vmem:[#allocation5 + $0x60] sm:$0xf] %v746
    %827 = vst [vmem:[#allocation5 + $0x64] sm:$0xf] %v747
    %828 = vst [vmem:[#allocation5 + $0x68] sm:$0xf] %v748
    %829 = vst [vmem:[#allocation5 + $0x6c] sm:$0xf] %v749
    %830 = vst [vmem:[#allocation5 + $0x70] sm:$0xf] %v750
    %831 = vst [vmem:[#allocation5 + $0x74] sm:$0xf] %v751
    %832 = vst [vmem:[#allocation5 + $0x78] sm:$0xf] %v752
    %833 = vst [vmem:[#allocation5 + $0x7c] sm:$0xf] %v753
    %834 = vst [vmem:[#allocation5 + $0x80] sm:$0xf] %v754
    %835 = vst [vmem:[#allocation5 + $0x84] sm:$0xf] %v755
    %836 = vst [vmem:[#allocation5 + $0x88] sm:$0xf] %v756
    %837 = vst [vmem:[#allocation5 + $0x8c] sm:$0xf] %v757
    %838 = vst [vmem:[#allocation5 + $0x90] sm:$0xf] %v758
    %839 = vst [vmem:[#allocation5 + $0x94] sm:$0xf] %v759
    %840 = vst [vmem:[#allocation5 + $0x98] sm:$0xf] %v760
    %841 = vst [vmem:[#allocation5 + $0x9c] sm:$0xf] %v761
    %842 = vst [vmem:[#allocation5 + $0xa0] sm:$0xf] %v762
    %843 = vst [vmem:[#allocation5 + $0xa4] sm:$0xf] %v763
    %844 = vst [vmem:[#allocation5 + $0xa8] sm:$0xf] %v764
    %845 = vst [vmem:[#allocation5 + $0xac] sm:$0xf] %v765
    %846 = vst [vmem:[#allocation5 + $0xb0] sm:$0xf] %v766
    %847 = vst [vmem:[#allocation5 + $0xb4] sm:$0xf] %v767
    %848 = vst [vmem:[#allocation5 + $0xb8] sm:$0xf] %v768
    %849 = vst [vmem:[#allocation5 + $0xbc] sm:$0xf] %v769
    %850 = vst [vmem:[#allocation5 + $0xc0] sm:$0xf] %v770
    %851 = vst [vmem:[#allocation5 + $0xc4] sm:$0xf] %v771
    %852 = vst [vmem:[#allocation5 + $0xc8] sm:$0xf] %v772
    %853 = vst [vmem:[#allocation5 + $0xcc] sm:$0xf] %v773
    %854 = vst [vmem:[#allocation5 + $0xd0] sm:$0xf] %v774
    %855 = vst [vmem:[#allocation5 + $0xd4] sm:$0xf] %v775
    %856 = vst [vmem:[#allocation5 + $0xd8] sm:$0xf] %v776
    %857 = vst [vmem:[#allocation5 + $0xdc] sm:$0xf] %v777
    %858 = vst [vmem:[#allocation5 + $0xe0] sm:$0xf] %v778
    %859 = vst [vmem:[#allocation5 + $0xe4] sm:$0xf] %v779
    %860 = vst [vmem:[#allocation5 + $0xe8] sm:$0xf] %v780
    %861 = vst [vmem:[#allocation5 + $0xec] sm:$0xf] %v781
    %862 = vst [vmem:[#allocation5 + $0xf0] sm:$0xf] %v782
    %863 = vst [vmem:[#allocation5 + $0xf4] sm:$0xf] %v783
    %864 = vst [vmem:[#allocation5 + $0xf8] sm:$0xf] %v784
    %865 = vst [vmem:[#allocation5 + $0xfc] sm:$0xf] %v785
    %866 = vst [vmem:[#allocation5 + $0x100] sm:$0xf] %v786
    %867 = vst [vmem:[#allocation5 + $0x104] sm:$0xf] %v787
    %868 = vst [vmem:[#allocation5 + $0x108] sm:$0xf] %v788
    %869 = vst [vmem:[#allocation5 + $0x10c] sm:$0xf] %v789
    %870 = vst [vmem:[#allocation5 + $0x110] sm:$0xf] %v790
    %871 = vst [vmem:[#allocation5 + $0x114] sm:$0xf] %v791
    %872 = vst [vmem:[#allocation5 + $0x118] sm:$0xf] %v792
    %873 = vst [vmem:[#allocation5 + $0x11c] sm:$0xf] %v793
    %874 = vst [vmem:[#allocation5 + $0x120] sm:$0xf] %v794
    %875 = vst [vmem:[#allocation5 + $0x124] sm:$0xf] %v795
    %876 = vst [vmem:[#allocation5 + $0x128] sm:$0xf] %v796
    %877 = vst [vmem:[#allocation5 + $0x12c] sm:$0xf] %v797
    %878 = vst [vmem:[#allocation5 + $0x130] sm:$0xf] %v798
    %879 = vst [vmem:[#allocation5 + $0x134] sm:$0xf] %v799
    %880 = vst [vmem:[#allocation5 + $0x138] sm:$0xf] %v800
    %881 = vst [vmem:[#allocation5 + $0x13c] sm:$0xf] %v801
    // Predicated region
    $region14: #{tpu_custom_call.1} parent=1 // pred_check
      _
    $region15: #{tpu_custom_call.1} parent=1 // pred_check_branch
      %883 = sbr.rel (0) target = $region17
    $region16: #{tpu_custom_call.1} parent=1 // pred_region
      %885 = vsyncadd [#allocation4], 0
      %s886 = sshll.u32 [#allocation5], 4
      %s887 = int_to_ptr.vmem [resolvable:$true] %s886
      %s888 = sshll.u32 %s2, 4
      %s889 = int_to_ptr.hbm [resolvable:$true] %s888
      %894 = dma.vmem_to_hbm [thread:$0]  %s887, 5120, %s889, [#allocation4], 64, 64, 4
    $region17: #{tpu_custom_call.1} parent=1 // pred_fallthru
      _
    // Predicated region
    $region18: #{tpu_custom_call.1} parent=1 // pred_check
      _
    $region19: #{tpu_custom_call.1} parent=1 // pred_check_branch
      %896 = sbr.rel (0) target = $region21
    $region20: #{tpu_custom_call.1} parent=1 // pred_region
      %898 = dma.done [#allocation4], 5120
    $region21: #{tpu_custom_call.1} parent=1 // pred_fallthru
      _
    %899 = vsyncpa [#allocation3], 1
    %900 = vsyncpa [#allocation4], 1

</llo_original>
